<compile_context>
chip_gen: v5e
topology: v5e:2x2
jax: 0.10.0
libtpu: 0.0.40
codegen_flags: <defaults>
</compile_context>

<pallas_src>
import jax
import jax.numpy as jnp
from jax.experimental import pallas as pl
from jax.experimental.pallas import tpu as pltpu

BN_EPS = 1e-5
_ROW_TILE_CAP = 2048          # rows per streamed block (x3 tile = cap*F*4 bytes)
_HEADROOM = 4 << 20           # honest VMEM plan + 4 MiB headroom


def _row_tile(n, cap=_ROW_TILE_CAP):
    """Balanced row tiling: tile (multiple of 8), padded extent, tile count."""
    n8 = ((n + 7) // 8) * 8
    n_tiles = max(1, (n8 + cap - 1) // cap)
    td = (((n8 + n_tiles - 1) // n_tiles) + 7) // 8 * 8
    return td, td * n_tiles, n_tiles


def _vmem_capacity_bytes():
    try:
        return int(pltpu.get_tpu_info().vmem_capacity_bytes)
    except Exception:
        return 64 << 20       # conservative fallback (v7x per-core VMEM)


def _fused_vmem_plan(n_pad, td, fdim):
    # Conservative: assume every operand (incl. the resident output block) is
    # double-buffered.
    return 4 * (2 * n_pad * fdim      # resident output block
                + 2 * td * fdim       # streamed x3 tile
                + 2 * fdim            # h2b row
                + 2 * fdim * fdim     # W1
                + 4 * fdim            # gamma + beta
                + 16 * fdim)          # (8, F) sum / ssq scratch


# ----------------------------------------------------------------------------
# Fused single-kernel path: VMEM-resident output, stats + normalize in-kernel.
# ----------------------------------------------------------------------------
def _fused_call(x3p, h2b, w1, gamma, beta, *, dim0, dim2, dim2_pad, td, n_td,
                fdim, n_valid):
    n_pad = dim0 * dim2_pad
    needs_mask = dim2_pad != dim2

    def kernel(x3_ref, h2b_ref, w1_ref, gamma_ref, beta_ref, o_ref,
               sum_ref, ssq_ref):
        i = pl.program_id(0)
        j = pl.program_id(1)

        @pl.when(jnp.logical_and(i == 0, j == 0))
        def _():
            sum_ref[...] = jnp.zeros_like(sum_ref)
            ssq_ref[...] = jnp.zeros_like(ssq_ref)

        # (TD, F) x (F, F): contract torch-layout W1 on its input-feature axis
        # (no wrapper-side transpose materialized).
        h = jax.lax.dot_general(
            x3_ref[...], w1_ref[...],
            dimension_numbers=(((1,), (1,)), ((), ())),
            preferred_element_type=jnp.float32)
        h = jnp.maximum(h + h2b_ref[...], 0.0)      # + (fea2d @ W2.T + b), ReLU

        # Stash the activation tile into the resident (N_pad, F) output block.
        row = pl.multiple_of(i * dim2_pad + j * td, 8)
        o_ref[pl.ds(row, td), :] = h

        # Moment accumulation: mask padded rows, then reduce TD -> 8 sublane
        # rows with elementwise vreg adds (8 -> 1 only once, at finalize).
        if needs_mask:
            r = jax.lax.broadcasted_iota(jnp.int32, (td, 1), 0)
            hm = jnp.where(j * td + r < dim2, h, 0.0)
        else:
            hm = h
        sum_ref[...] += jnp.sum(hm.reshape(td // 8, 8, fdim), axis=0)
        ssq_ref[...] += jnp.sum((hm * hm).reshape(td // 8, 8, fdim), axis=0)

        # Last grid step: finalize BN stats, normalize resident block in place.
        @pl.when(jnp.logical_and(i == dim0 - 1, j == n_td - 1))
        def _():
            s = jnp.sum(sum_ref[...], axis=0, keepdims=True)        # (1, F)
            ss = jnp.sum(ssq_ref[...], axis=0, keepdims=True)
            mean = s * (1.0 / n_valid)
            var = jnp.maximum(ss * (1.0 / n_valid) - mean * mean, 0.0)
            inv = jax.lax.rsqrt(var + BN_EPS)
            scale = gamma_ref[...] * inv
            shift = beta_ref[...] - mean * scale
            o_ref[...] = o_ref[...] * scale + shift

    vmem = _fused_vmem_plan(n_pad, td, fdim) + _HEADROOM
    out = pl.pallas_call(
        kernel,
        out_shape=jax.ShapeDtypeStruct((n_pad, fdim), jnp.float32),
        grid=(dim0, n_td),
        in_specs=[
            pl.BlockSpec((None, td, fdim), lambda i, j: (i, j, 0)),   # x3 tile
            pl.BlockSpec((None, 1, fdim), lambda i, j: (i, 0, 0)),    # h2b row
            # W1 / gamma / beta are grid-constant -> Pallas never re-DMAs them.
            pl.BlockSpec((fdim, fdim), lambda i, j: (0, 0)),
            pl.BlockSpec((1, fdim), lambda i, j: (0, 0)),
            pl.BlockSpec((1, fdim), lambda i, j: (0, 0)),
        ],
        out_specs=pl.BlockSpec((n_pad, fdim), lambda i, j: (0, 0)),   # resident
        scratch_shapes=[pltpu.VMEM((8, fdim), jnp.float32),
                        pltpu.VMEM((8, fdim), jnp.float32)],
        compiler_params=pltpu.CompilerParams(
            dimension_semantics=("arbitrary", "arbitrary"),
            vmem_limit_bytes=int(vmem)),
    )(x3p, h2b, w1, gamma, beta)
    return out.reshape(dim0, dim2_pad, fdim)


# ----------------------------------------------------------------------------
# Two-pass recompute path: pass 1 = stats only, pass 2 = recompute + normalize.
# ----------------------------------------------------------------------------
def _two_pass_call(x3p, h2b, w1, gamma, beta, *, dim0, dim2, dim2_pad, td, n_td,
                   fdim, n_valid):
    needs_mask = dim2_pad != dim2

    # ---- pass 1: per-dim0 (8, F) moment accumulators (megacore-friendly) ----
    def stats_kernel(x3_ref, h2b_ref, w1_ref, sum_ref, ssq_ref):
        j = pl.program_id(1)

        @pl.when(j == 0)
        def _():
            sum_ref[...] = jnp.zeros_like(sum_ref)
            ssq_ref[...] = jnp.zeros_like(ssq_ref)

        h = jax.lax.dot_general(
            x3_ref[...], w1_ref[...],
            dimension_numbers=(((1,), (1,)), ((), ())),
            preferred_element_type=jnp.float32)
        h = jnp.maximum(h + h2b_ref[...], 0.0)
        if needs_mask:
            r = jax.lax.broadcasted_iota(jnp.int32, (td, 1), 0)
            h = jnp.where(j * td + r < dim2, h, 0.0)
        sum_ref[...] += jnp.sum(h.reshape(td // 8, 8, fdim), axis=0)
        ssq_ref[...] += jnp.sum((h * h).reshape(td // 8, 8, fdim), axis=0)

    plan1 = 4 * (2 * td * fdim + 2 * fdim + 2 * fdim * fdim + 4 * 8 * fdim)
    sums, ssqs = pl.pallas_call(
        stats_kernel,
        out_shape=(jax.ShapeDtypeStruct((dim0, 8, fdim), jnp.float32),
                   jax.ShapeDtypeStruct((dim0, 8, fdim), jnp.float32)),
        grid=(dim0, n_td),
        in_specs=[
            pl.BlockSpec((None, td, fdim), lambda i, j: (i, j, 0)),
            pl.BlockSpec((None, 1, fdim), lambda i, j: (i, 0, 0)),
            pl.BlockSpec((fdim, fdim), lambda i, j: (0, 0)),
        ],
        out_specs=(pl.BlockSpec((None, 8, fdim), lambda i, j: (i, 0, 0)),
                   pl.BlockSpec((None, 8, fdim), lambda i, j: (i, 0, 0))),
        compiler_params=pltpu.CompilerParams(
            dimension_semantics=("parallel", "arbitrary"),
            vmem_limit_bytes=int(plan1 + _HEADROOM)),
    )(x3p, h2b, w1)

    # ---- finalize BN stats & fold gamma/beta (tiny (F,) vector math) --------
    s = jnp.sum(sums, axis=(0, 1))
    ss = jnp.sum(ssqs, axis=(0, 1))
    mean = s / n_valid
    var = jnp.maximum(ss / n_valid - mean * mean, 0.0)
    inv = jax.lax.rsqrt(var + BN_EPS)
    scale = (gamma.reshape(-1) * inv).reshape(1, fdim)
    shift = (beta.reshape(-1) - mean * scale.reshape(-1)).reshape(1, fdim)

    # ---- pass 2: recompute h and normalize (no stored intermediate) ---------
    def apply_kernel(x3_ref, h2b_ref, w1_ref, scale_ref, shift_ref, o_ref):
        h = jax.lax.dot_general(
            x3_ref[...], w1_ref[...],
            dimension_numbers=(((1,), (1,)), ((), ())),
            preferred_element_type=jnp.float32)
        h = jnp.maximum(h + h2b_ref[...], 0.0)
        o_ref[...] = h * scale_ref[...] + shift_ref[...]

    plan2 = 4 * (4 * td * fdim + 2 * fdim + 2 * fdim * fdim + 4 * fdim)
    out = pl.pallas_call(
        apply_kernel,
        out_shape=jax.ShapeDtypeStruct((dim0, dim2_pad, fdim), jnp.float32),
        grid=(dim0, n_td),
        in_specs=[
            pl.BlockSpec((None, td, fdim), lambda i, j: (i, j, 0)),
            pl.BlockSpec((None, 1, fdim), lambda i, j: (i, 0, 0)),
            pl.BlockSpec((fdim, fdim), lambda i, j: (0, 0)),
            pl.BlockSpec((1, fdim), lambda i, j: (0, 0)),
            pl.BlockSpec((1, fdim), lambda i, j: (0, 0)),
        ],
        out_specs=pl.BlockSpec((None, td, fdim), lambda i, j: (i, j, 0)),
        compiler_params=pltpu.CompilerParams(
            dimension_semantics=("parallel", "parallel"),
            vmem_limit_bytes=int(plan2 + _HEADROOM)),
    )(x3p, h2b, w1, scale, shift)
    return out


# ----------------------------------------------------------------------------
# Public wrapper.
# ----------------------------------------------------------------------------
def skip_fusing_forward(fea3d, fea2d, dim0, dim2, params, force_two_pass=False):
    """fea3d: (dim0, dim2, F) or (dim0*dim2, F); fea2d: (dim0, F) -> (dim0, 1, dim2, F)."""
    fdim = fea3d.shape[-1]
    n_valid = dim0 * dim2

    w = params["linear_w"].astype(jnp.float32)          # (F, 2F) torch (out, in)
    w1 = w[:, :fdim]                                     # acts on fea3d features
    w2 = w[:, fdim:]                                     # acts on fea2d features
    b = params["linear_b"].astype(jnp.float32)

    # fea2d contribution + bias, computed once per dim0 row (dim2-fold less MXU
    # and DMA work than the materialized repeat); broadcast-added in-kernel.
    h2b = (jax.lax.dot_general(
               fea2d.astype(jnp.float32), w2,
               dimension_numbers=(((1,), (1,)), ((), ())),
               preferred_element_type=jnp.float32) + b).reshape(dim0, 1, fdim)

    td, dim2_pad, n_td = _row_tile(dim2)
    x3 = fea3d.astype(jnp.float32).reshape(dim0, dim2, fdim)
    x3p = (jnp.pad(x3, ((0, 0), (0, dim2_pad - dim2), (0, 0)))
           if dim2_pad != dim2 else x3)

    gamma = params["bn_gamma"].astype(jnp.float32).reshape(1, fdim)
    beta = params["bn_beta"].astype(jnp.float32).reshape(1, fdim)

    n_pad = dim0 * dim2_pad
    fused_vmem = _fused_vmem_plan(n_pad, td, fdim) + _HEADROOM
    use_fused = (not force_two_pass) and fused_vmem <= _vmem_capacity_bytes() // 2

    kw = dict(dim0=dim0, dim2=dim2, dim2_pad=dim2_pad, td=td, n_td=n_td,
              fdim=fdim, n_valid=n_valid)
    if use_fused:
        out = _fused_call(x3p, h2b, w1, gamma, beta, **kw)
    else:
        out = _two_pass_call(x3p, h2b, w1, gamma, beta, **kw)

    out = out[:, :dim2, :]                              # drop padded rows
    return out.reshape(dim0, 1, dim2, fdim)


def _reference_forward(fea3d, fea2d, dim0, dim2, params):
    """Plain-JAX mirror of the torch forward (for verification)."""
    fdim = fea3d.shape[-1]
    f3 = fea3d.reshape(dim0, 1, dim2, fdim)
    f2 = jnp.repeat(fea2d[:, None, :], dim2, axis=1).reshape(dim0, 1, dim2, fdim)
    fused = jnp.concatenate((f3, f2), axis=-1).reshape(-1, 2 * fdim)
    h = fused @ params["linear_w"].T + params["linear_b"]
    h = jnp.maximum(h, 0.0)
    mean = jnp.mean(h, axis=0, keepdims=True)
    var = jnp.mean((h - mean) ** 2, axis=0, keepdims=True)
    h = params["bn_gamma"] * (h - mean) / jnp.sqrt(var + BN_EPS) + params["bn_beta"]
    return h.reshape(dim0, 1, dim2, fdim)


if __name__ == "__main__":
    key = jax.random.PRNGKey(0)
    fdim = 128

    def make_inputs(k, dim0, dim2):
        k1, k2, k3, k4 = jax.random.split(k, 4)
        fea3d = jax.random.normal(k1, (dim0, dim2, fdim), dtype=jnp.float32)
        fea2d = jax.random.normal(k2, (dim0, fdim), dtype=jnp.float32)
        params = {
            "linear_w": 0.05 * jax.random.normal(k3, (fdim, 2 * fdim), dtype=jnp.float32),
            "linear_b": 0.01 * jax.random.normal(k4, (fdim,), dtype=jnp.float32),
            "bn_gamma": jnp.ones((fdim,), dtype=jnp.float32),
            "bn_beta": jnp.zeros((fdim,), dtype=jnp.float32),
        }
        return fea3d, fea2d, params

    fwd = jax.jit(skip_fusing_forward,
                  static_argnames=("dim0", "dim2", "force_two_pass"))

    cases = [
        (2, 8, False),    # fused single-kernel path (VMEM-resident output)
        (2, 12, False),   # fused path with padded dim2 + masked stats
        (2, 12, True),    # two-pass recompute path (large-N fallback)
    ]
    for idx, (dim0, dim2, force_two_pass) in enumerate(cases):
        kc = jax.random.fold_in(key, idx)
        fea3d, fea2d, params = make_inputs(kc, dim0, dim2)
        out = jax.block_until_ready(
            fwd(fea3d, fea2d, dim0=dim0, dim2=dim2, params=params,
                force_two_pass=force_two_pass))
        ref = _reference_forward(fea3d, fea2d, dim0, dim2, params)
        assert out.shape == (dim0, 1, dim2, fdim)
        assert jnp.allclose(out, ref, atol=2e-4, rtol=2e-4), \
            f"mismatch vs reference (case {idx})"
    print("KERNEL_OK")
</pallas_src>

<mosaic_0001>
module attributes {stable_mosaic.version = 11 : i64} {
  func.func @kernel(%arg0: i32, %arg1: i32, %arg2: memref<1x8x128xf32, #tpu.memory_space<vmem>>, %arg3: memref<1x1x128xf32, #tpu.memory_space<vmem>>, %arg4: memref<128x128xf32, #tpu.memory_space<vmem>>, %arg5: memref<1x128xf32, #tpu.memory_space<vmem>>, %arg6: memref<1x128xf32, #tpu.memory_space<vmem>>, %arg7: memref<16x128xf32, #tpu.memory_space<vmem>>, %arg8: memref<8x128xf32, #tpu.memory_space<vmem>>, %arg9: memref<8x128xf32, #tpu.memory_space<vmem>>) attributes {dimension_semantics = [#tpu.dimension_semantics<arbitrary>, #tpu.dimension_semantics<arbitrary>], iteration_bounds = array<i64: 2, 1>, scalar_prefetch = 0 : i64, scratch_operands = 2 : i64, tpu.core_type = #tpu.core_type<tc>, window_params = [{transform_indices = @transform_0, window_bounds = array<i64: 1, 8, 128>}, {transform_indices = @transform_1, window_bounds = array<i64: 1, 1, 128>}, {pipeline_mode = #tpu.pipeline_mode<synchronous>, transform_indices = @transform_2, window_bounds = array<i64: 128, 128>}, {pipeline_mode = #tpu.pipeline_mode<synchronous>, transform_indices = @transform_3, window_bounds = array<i64: 1, 128>}, {pipeline_mode = #tpu.pipeline_mode<synchronous>, transform_indices = @transform_4, window_bounds = array<i64: 1, 128>}, {pipeline_mode = #tpu.pipeline_mode<synchronous>, transform_indices = @transform_5, window_bounds = array<i64: 16, 128>}]} {
    %c0_i32 = arith.constant 0 : i32
    %0 = arith.cmpi eq, %arg0, %c0_i32 : i32
    %c0_i32_0 = arith.constant 0 : i32
    %1 = arith.cmpi eq, %arg1, %c0_i32_0 : i32
    %2 = arith.andi %0, %1 : i1
    %3 = arith.extui %2 : i1 to i32
    %c0_i32_1 = arith.constant 0 : i32
    %4 = arith.cmpi ne, %3, %c0_i32_1 : i32
    scf.if %4 {
      %cst_24 = arith.constant 0.000000e+00 : f32
      %37 = vector.broadcast %cst_24 : f32 to vector<8x128xf32>
      %c0_25 = arith.constant 0 : index
      %c0_26 = arith.constant 0 : index
      %38 = vector.load %arg8[%c0_25, %c0_26] : memref<8x128xf32, #tpu.memory_space<vmem>>, vector<8x128xf32>
      tpu.vector_store %arg8[%c0_25, %c0_26], %37 {strides = array<i32>} : memref<8x128xf32, #tpu.memory_space<vmem>>, vector<8x128xf32>,
      %cst_27 = arith.constant 0.000000e+00 : f32
      %39 = vector.broadcast %cst_27 : f32 to vector<8x128xf32>
      %c0_28 = arith.constant 0 : index
      %c0_29 = arith.constant 0 : index
      %40 = vector.load %arg9[%c0_28, %c0_29] : memref<8x128xf32, #tpu.memory_space<vmem>>, vector<8x128xf32>
      tpu.vector_store %arg9[%c0_28, %c0_29], %39 {strides = array<i32>} : memref<8x128xf32, #tpu.memory_space<vmem>>, vector<8x128xf32>,
    } else {
    }
    %c0 = arith.constant 0 : index
    %c0_2 = arith.constant 0 : index
    %c0_3 = arith.constant 0 : index
    %5 = vector.load %arg2[%c0, %c0_2, %c0_3] : memref<1x8x128xf32, #tpu.memory_space<vmem>>, vector<1x8x128xf32>
    %6 = vector.shape_cast %5 : vector<1x8x128xf32> to vector<8x128xf32>
    %c0_4 = arith.constant 0 : index
    %c0_5 = arith.constant 0 : index
    %7 = vector.load %arg4[%c0_4, %c0_5] : memref<128x128xf32, #tpu.memory_space<vmem>>, vector<128x128xf32>
    %cst = arith.constant dense<0.000000e+00> : vector<8x128xf32>
    %8 = tpu.matmul %6, %7, %cst {dimension_numbers = #tpu.dot_dimension_numbers<[1], [1], [0], [0], [0, 0, 1, 0], [], []>} : vector<8x128xf32>, vector<128x128xf32>, vector<8x128xf32> -> vector<8x128xf32>
    %c0_6 = arith.constant 0 : index
    %c0_7 = arith.constant 0 : index
    %c0_8 = arith.constant 0 : index
    %9 = vector.load %arg3[%c0_6, %c0_7, %c0_8] : memref<1x1x128xf32, #tpu.memory_space<vmem>>, vector<1x1x128xf32>
    %10 = vector.shape_cast %9 : vector<1x1x128xf32> to vector<1x128xf32>
    %11 = vector.broadcast %10 : vector<1x128xf32> to vector<8x128xf32>
    %12 = arith.addf %8, %11 : vector<8x128xf32>
    %cst_9 = arith.constant 0.000000e+00 : f32
    %13 = vector.broadcast %cst_9 : f32 to vector<8x128xf32>
    %14 = arith.maximumf %12, %13 : vector<8x128xf32>
    %c8_i32 = arith.constant 8 : i32
    %15 = arith.muli %arg0, %c8_i32 : i32
    %c8_i32_10 = arith.constant 8 : i32
    %16 = arith.muli %arg1, %c8_i32_10 : i32
    %17 = arith.addi %15, %16 : i32
    %18 = tpu.assume_multiple %17, 8 : i32
    %19 = arith.index_cast %18 : i32 to index
    %c0_11 = arith.constant 0 : index
    %20 = vector.load %arg7[%19, %c0_11] : memref<16x128xf32, #tpu.memory_space<vmem>>, vector<8x128xf32>
    tpu.vector_store %arg7[%19, %c0_11], %14 {strides = array<i32>} : memref<16x128xf32, #tpu.memory_space<vmem>>, vector<8x128xf32>,
    %c0_12 = arith.constant 0 : index
    %c0_13 = arith.constant 0 : index
    %21 = vector.load %arg8[%c0_12, %c0_13] : memref<8x128xf32, #tpu.memory_space<vmem>>, vector<8x128xf32>
    %22 = vector.shape_cast %14 : vector<8x128xf32> to vector<1x8x128xf32>
    %cst_14 = arith.constant dense<0.000000e+00> : vector<8x128xf32>
    %23 = vector.multi_reduction <add>, %22, %cst_14 [0] : vector<1x8x128xf32> to vector<8x128xf32>
    %24 = arith.addf %21, %23 : vector<8x128xf32>
    %c0_15 = arith.constant 0 : index
    %c0_16 = arith.constant 0 : index
    %25 = vector.load %arg8[%c0_15, %c0_16] : memref<8x128xf32, #tpu.memory_space<vmem>>, vector<8x128xf32>
    tpu.vector_store %arg8[%c0_15, %c0_16], %24 {strides = array<i32>} : memref<8x128xf32, #tpu.memory_space<vmem>>, vector<8x128xf32>,
    %c0_17 = arith.constant 0 : index
    %c0_18 = arith.constant 0 : index
    %26 = vector.load %arg9[%c0_17, %c0_18] : memref<8x128xf32, #tpu.memory_space<vmem>>, vector<8x128xf32>
    %27 = arith.mulf %14, %14 : vector<8x128xf32>
    %28 = vector.shape_cast %27 : vector<8x128xf32> to vector<1x8x128xf32>
    %cst_19 = arith.constant dense<0.000000e+00> : vector<8x128xf32>
    %29 = vector.multi_reduction <add>, %28, %cst_19 [0] : vector<1x8x128xf32> to vector<8x128xf32>
    %30 = arith.addf %26, %29 : vector<8x128xf32>
    %c0_20 = arith.constant 0 : index
    %c0_21 = arith.constant 0 : index
    %31 = vector.load %arg9[%c0_20, %c0_21] : memref<8x128xf32, #tpu.memory_space<vmem>>, vector<8x128xf32>
    tpu.vector_store %arg9[%c0_20, %c0_21], %30 {strides = array<i32>} : memref<8x128xf32, #tpu.memory_space<vmem>>, vector<8x128xf32>,
    %c1_i32 = arith.constant 1 : i32
    %32 = arith.cmpi eq, %arg0, %c1_i32 : i32
    %c0_i32_22 = arith.constant 0 : i32
    %33 = arith.cmpi eq, %arg1, %c0_i32_22 : i32
    %34 = arith.andi %32, %33 : i1
    %35 = arith.extui %34 : i1 to i32
    %c0_i32_23 = arith.constant 0 : i32
    %36 = arith.cmpi ne, %35, %c0_i32_23 : i32
    scf.if %36 {
      %c0_24 = arith.constant 0 : index
      %c0_25 = arith.constant 0 : index
      %37 = vector.load %arg8[%c0_24, %c0_25] : memref<8x128xf32, #tpu.memory_space<vmem>>, vector<8x128xf32>
      %cst_26 = arith.constant dense<0.000000e+00> : vector<128xf32>
      %38 = vector.multi_reduction <add>, %37, %cst_26 [0] : vector<8x128xf32> to vector<128xf32>
      %39 = vector.shape_cast %38 : vector<128xf32> to vector<1x128xf32>
      %c0_27 = arith.constant 0 : index
      %c0_28 = arith.constant 0 : index
      %40 = vector.load %arg9[%c0_27, %c0_28] : memref<8x128xf32, #tpu.memory_space<vmem>>, vector<8x128xf32>
      %cst_29 = arith.constant dense<0.000000e+00> : vector<128xf32>
      %41 = vector.multi_reduction <add>, %40, %cst_29 [0] : vector<8x128xf32> to vector<128xf32>
      %42 = vector.shape_cast %41 : vector<128xf32> to vector<1x128xf32>
      %cst_30 = arith.constant 6.250000e-02 : f32
      %43 = vector.broadcast %cst_30 : f32 to vector<1x128xf32>
      %44 = arith.mulf %39, %43 : vector<1x128xf32>
      %cst_31 = arith.constant 6.250000e-02 : f32
      %45 = vector.broadcast %cst_31 : f32 to vector<1x128xf32>
      %46 = arith.mulf %42, %45 : vector<1x128xf32>
      %47 = arith.mulf %44, %44 : vector<1x128xf32>
      %48 = arith.subf %46, %47 : vector<1x128xf32>
      %cst_32 = arith.constant 0.000000e+00 : f32
      %49 = vector.broadcast %cst_32 : f32 to vector<1x128xf32>
      %50 = arith.maximumf %48, %49 : vector<1x128xf32>
      %cst_33 = arith.constant 9.99999974E-6 : f32
      %51 = vector.broadcast %cst_33 : f32 to vector<1x128xf32>
      %52 = arith.addf %50, %51 : vector<1x128xf32>
      %53 = math.rsqrt %52 : vector<1x128xf32>
      %c0_34 = arith.constant 0 : index
      %c0_35 = arith.constant 0 : index
      %54 = vector.load %arg5[%c0_34, %c0_35] : memref<1x128xf32, #tpu.memory_space<vmem>>, vector<1x128xf32>
      %55 = arith.mulf %54, %53 : vector<1x128xf32>
      %c0_36 = arith.constant 0 : index
      %c0_37 = arith.constant 0 : index
      %56 = vector.load %arg6[%c0_36, %c0_37] : memref<1x128xf32, #tpu.memory_space<vmem>>, vector<1x128xf32>
      %57 = arith.mulf %44, %55 : vector<1x128xf32>
      %58 = arith.subf %56, %57 : vector<1x128xf32>
      %c0_38 = arith.constant 0 : index
      %c0_39 = arith.constant 0 : index
      %59 = vector.load %arg7[%c0_38, %c0_39] : memref<16x128xf32, #tpu.memory_space<vmem>>, vector<16x128xf32>
      %60 = vector.broadcast %55 : vector<1x128xf32> to vector<16x128xf32>
      %61 = arith.mulf %59, %60 : vector<16x128xf32>
      %62 = vector.broadcast %58 : vector<1x128xf32> to vector<16x128xf32>
      %63 = arith.addf %61, %62 : vector<16x128xf32>
      %c0_40 = arith.constant 0 : index
      %c0_41 = arith.constant 0 : index
      %64 = vector.load %arg7[%c0_40, %c0_41] : memref<16x128xf32, #tpu.memory_space<vmem>>, vector<16x128xf32>
      tpu.vector_store %arg7[%c0_40, %c0_41], %63 {strides = array<i32>} : memref<16x128xf32, #tpu.memory_space<vmem>>, vector<16x128xf32>,
    } else {
    }
    return
  }
  func.func @transform_0(%arg0: i32, %arg1: i32) -> (i32, i32, i32) {
    %c0_i32 = arith.constant 0 : i32
    %c0_i32_0 = arith.constant 0 : i32
    return %arg0, %arg1, %c0_i32 : i32, i32, i32
  }
  func.func @transform_1(%arg0: i32, %arg1: i32) -> (i32, i32, i32) {
    %c0_i32 = arith.constant 0 : i32
    %c0_i32_0 = arith.constant 0 : i32
    %c0_i32_1 = arith.constant 0 : i32
    return %arg0, %c0_i32, %c0_i32_0 : i32, i32, i32
  }
  func.func @transform_2(%arg0: i32, %arg1: i32) -> (i32, i32) {
    %c0_i32 = arith.constant 0 : i32
    %c0_i32_0 = arith.constant 0 : i32
    %c0_i32_1 = arith.constant 0 : i32
    return %c0_i32, %c0_i32_0 : i32, i32
  }
  func.func @transform_3(%arg0: i32, %arg1: i32) -> (i32, i32) {
    %c0_i32 = arith.constant 0 : i32
    %c0_i32_0 = arith.constant 0 : i32
    %c0_i32_1 = arith.constant 0 : i32
    return %c0_i32, %c0_i32_0 : i32, i32
  }
  func.func @transform_4(%arg0: i32, %arg1: i32) -> (i32, i32) {
    %c0_i32 = arith.constant 0 : i32
    %c0_i32_0 = arith.constant 0 : i32
    %c0_i32_1 = arith.constant 0 : i32
    return %c0_i32, %c0_i32_0 : i32, i32
  }
  func.func @transform_5(%arg0: i32, %arg1: i32) -> (i32, i32) {
    %c0_i32 = arith.constant 0 : i32
    %c0_i32_0 = arith.constant 0 : i32
    %c0_i32_1 = arith.constant 0 : i32
    return %c0_i32, %c0_i32_0 : i32, i32
  }
}

</mosaic_0001>

<llo_original>
// kernel: skip_fusing_forward.1
$region0: #{skip_fusing_forward.1}
  #allocation0 [shape = 'u32[]', space=smem, size = 0x4, offset = 0x4, fixed_abs, tag = 'smem constant byte address 0x4 - core index']
  #allocation1 [shape = 'u32[72,128]{1,0:T(1,128)}', space=vmem, size = 0x9000, scoped, tag = 'internal scratch']
  #allocation2 [shape = 'f32[8,128]{1,0:T(8,128)}', space=vmem, size = 0x1000, scoped, tag = 'scratch operand']
  #allocation3 [shape = 'f32[8,128]{1,0:T(8,128)}', space=vmem, size = 0x1000, scoped, tag = 'scratch operand']
  %s0 = inlined_call_operand.vmem [shape: f32[2,8,128], index: 0, kind: input, shape index: {}]
  %s1 = inlined_call_operand.vmem [shape: f32[2,1,128], index: 1, kind: input, shape index: {}]
  %s2 = inlined_call_operand.vmem [shape: f32[128,128], index: 2, kind: input, shape index: {}]
  %s3 = inlined_call_operand.vmem [shape: f32[1,128], index: 3, kind: input, shape index: {}]
  %s4 = inlined_call_operand.vmem [shape: f32[1,128], index: 4, kind: input, shape index: {}]
  %s5 = inlined_call_operand.hbm [shape: f32[16,128], index: 5, kind: output, shape index: {}]
  %s6 = sld [smem:[#allocation0]]
  $region61: #{skip_fusing_forward.1} parent=0
    _
  %s8 = ssub.s32 1, %s6
  %s9 = scalar_select 0, %s8, %s6
  $region1: #{skip_fusing_forward.1} parent=0
    #allocation4 [shape = 'u8[8192]{0}', space=vmem, size = 0x2000, scoped, tag = 'output window, operand 0, single buffered']
    #allocation5 [shape = 's32[2]{0}', space=sflag, size = 0x8, scoped, tag = 'scoped memory for skip_fusing_forward.1']
    %10 = vsyncpa [#allocation5], 0
    loop: start=0, step=1, limit=4
    $region2: #{skip_fusing_forward.1} parent=1 // loop_pre_header
      _
    $region3: #{skip_fusing_forward.1} parent=1 // loop_header
      %s12 = sphi 0, %s16
      %p13 = scmp.ge.s32.totalorder %s12, 4
      %s19 = sphi 0, %s31
      %s20 = sphi 0, %s27
      %s21 = sphi 0, %s19
      %s22 = sphi 0, %s20
      %s23 = sphi 0, %s21
      %s24 = sphi 0, %s22
      %s36 = sphi 0, %s38
      %s39 = sphi 0, %s36
      %s40 = sphi 0, %s39
      %s56 = sphi 0, %s40
      %s62 = sphi 0, %s64
      %s65 = sphi 0, %s62
      %s66 = sphi 0, %s65
      %s82 = sphi 0, %s66
      %s86 = sphi 0, %s86
      %s88 = sphi 0, %s86
      %s89 = sphi 0, %s88
      %s103 = sphi 0, %s89
      %s107 = sphi 0, %s107
      %s109 = sphi 0, %s107
      %s110 = sphi 0, %s109
      %s124 = sphi 0, %s110
      %s128 = sphi 0, %s128
      %s130 = sphi 0, %s128
      %s131 = sphi 0, %s130
      %s145 = sphi 0, %s131
      %s149 = sphi 0, %s149
      %s151 = sphi 0, %s149
      %s152 = sphi 0, %s151
      %s166 = sphi 0, %s152
    $region4: #{skip_fusing_forward.1} parent=1 // loop_header_branch
      %15 = sbr.rel (%p13) target = $region8
    $region5: #{skip_fusing_forward.1} parent=1 // loop_body
      %s17 = ssub.s32 %s12, 1
      %s18 = ssub.s32 %s12, 2
      %s25 = sadd.s32 1, %s20
      %p26 = scmp.ge.s32.totalorder %s25, 1
      %s27 = scalar_select %p26, 0, %s25
      %s28 = sadd.s32 1, %s19
      %s29 = scalar_select %p26, %s28, %s19
      %p30 = scmp.ge.s32.totalorder %s29, 2
      %s31 = scalar_select %p30, 0, %s29
      %s32 = ssub.s32 %s19, %s31
      %s33 = ssub.s32 %s20, %s27
      %s34 = sor.u32 %s32, %s33
      %p35 = scmp.eq.s32.totalorder %s34, 0
      %s37 = sadd.s32 %s36, 1
      %s38 = scalar_select %p35, %s36, %s37
      %p41 = pneg %p35
      %p42 = scmp.eq.s32.totalorder %s12, 1
      %p43 = por %p41, %p42
      %p44 = scmp.ne.s32.totalorder %s36, %s39
      %p45 = scmp.eq.s32.totalorder %s12, 0
      %p46 = por %p44, %p45
      %p47 = scmp.ne.s32.totalorder %s36, %s39
      %p48 = scmp.eq.s32.totalorder %s17, 1
      %p49 = por %p47, %p48
      %p50 = scmp.ne.s32.totalorder %s39, %s40
      %p51 = scmp.eq.s32.totalorder %s17, 0
      %p52 = por %p50, %p51
      %p53 = scmp.ne.s32.totalorder %s39, %s40
      %p54 = scmp.eq.s32.totalorder %s18, 1
      %p55 = por %p53, %p54
      %p57 = scmp.ne.s32.totalorder %s40, %s56
      %p58 = scmp.eq.s32.totalorder %s18, 0
      %p59 = por %p57, %p58
      %s60 = ssub.s32 %s19, %s31
      %p61 = scmp.eq.s32.totalorder %s60, 0
      %s63 = sadd.s32 %s62, 1
      %s64 = scalar_select %p61, %s62, %s63
      %p67 = pneg %p61
      %p68 = scmp.eq.s32.totalorder %s12, 1
      %p69 = por %p67, %p68
      %p70 = scmp.ne.s32.totalorder %s62, %s65
      %p71 = scmp.eq.s32.totalorder %s12, 0
      %p72 = por %p70, %p71
      %p73 = scmp.ne.s32.totalorder %s62, %s65
      %p74 = scmp.eq.s32.totalorder %s17, 1
      %p75 = por %p73, %p74
      %p76 = scmp.ne.s32.totalorder %s65, %s66
      %p77 = scmp.eq.s32.totalorder %s17, 0
      %p78 = por %p76, %p77
      %p79 = scmp.ne.s32.totalorder %s65, %s66
      %p80 = scmp.eq.s32.totalorder %s18, 1
      %p81 = por %p79, %p80
      %p83 = scmp.ne.s32.totalorder %s66, %s82
      %p84 = scmp.eq.s32.totalorder %s18, 0
      %p85 = por %p83, %p84
      %s87 = sadd.s32 %s86, 1
      %p90 = scmp.eq.s32.totalorder %s12, 1
      %p91 = scmp.ne.s32.totalorder %s86, %s88
      %p92 = scmp.eq.s32.totalorder %s12, 0
      %p93 = por %p91, %p92
      %p94 = scmp.ne.s32.totalorder %s86, %s88
      %p95 = scmp.eq.s32.totalorder %s17, 1
      %p96 = por %p94, %p95
      %p97 = scmp.ne.s32.totalorder %s88, %s89
      %p98 = scmp.eq.s32.totalorder %s17, 0
      %p99 = por %p97, %p98
      %p100 = scmp.ne.s32.totalorder %s88, %s89
      %p101 = scmp.eq.s32.totalorder %s18, 1
      %p102 = por %p100, %p101
      %p104 = scmp.ne.s32.totalorder %s89, %s103
      %p105 = scmp.eq.s32.totalorder %s18, 0
      %p106 = por %p104, %p105
      %s108 = sadd.s32 %s107, 1
      %p111 = scmp.eq.s32.totalorder %s12, 1
      %p112 = scmp.ne.s32.totalorder %s107, %s109
      %p113 = scmp.eq.s32.totalorder %s12, 0
      %p114 = por %p112, %p113
      %p115 = scmp.ne.s32.totalorder %s107, %s109
      %p116 = scmp.eq.s32.totalorder %s17, 1
      %p117 = por %p115, %p116
      %p118 = scmp.ne.s32.totalorder %s109, %s110
      %p119 = scmp.eq.s32.totalorder %s17, 0
      %p120 = por %p118, %p119
      %p121 = scmp.ne.s32.totalorder %s109, %s110
      %p122 = scmp.eq.s32.totalorder %s18, 1
      %p123 = por %p121, %p122
      %p125 = scmp.ne.s32.totalorder %s110, %s124
      %p126 = scmp.eq.s32.totalorder %s18, 0
      %p127 = por %p125, %p126
      %s129 = sadd.s32 %s128, 1
      %p132 = scmp.eq.s32.totalorder %s12, 1
      %p133 = scmp.ne.s32.totalorder %s128, %s130
      %p134 = scmp.eq.s32.totalorder %s12, 0
      %p135 = por %p133, %p134
      %p136 = scmp.ne.s32.totalorder %s128, %s130
      %p137 = scmp.eq.s32.totalorder %s17, 1
      %p138 = por %p136, %p137
      %p139 = scmp.ne.s32.totalorder %s130, %s131
      %p140 = scmp.eq.s32.totalorder %s17, 0
      %p141 = por %p139, %p140
      %p142 = scmp.ne.s32.totalorder %s130, %s131
      %p143 = scmp.eq.s32.totalorder %s18, 1
      %p144 = por %p142, %p143
      %p146 = scmp.ne.s32.totalorder %s131, %s145
      %p147 = scmp.eq.s32.totalorder %s18, 0
      %p148 = por %p146, %p147
      %s150 = sadd.s32 %s149, 1
      %p153 = scmp.eq.s32.totalorder %s12, 1
      %p154 = scmp.ne.s32.totalorder %s149, %s151
      %p155 = scmp.eq.s32.totalorder %s12, 0
      %p156 = por %p154, %p155
      %p157 = scmp.ne.s32.totalorder %s149, %s151
      %p158 = scmp.eq.s32.totalorder %s17, 1
      %p159 = por %p157, %p158
      %p160 = scmp.ne.s32.totalorder %s151, %s152
      %p161 = scmp.eq.s32.totalorder %s17, 0
      %p162 = por %p160, %p161
      %p163 = scmp.ne.s32.totalorder %s151, %s152
      %p164 = scmp.eq.s32.totalorder %s18, 1
      %p165 = por %p163, %p164
      %p167 = scmp.ne.s32.totalorder %s152, %s166
      %p168 = scmp.eq.s32.totalorder %s18, 0
      %p169 = por %p167, %p168
      %p170 = scmp.le.s32.totalorder 1, %s12
      %p171 = scmp.lt.s32.totalorder %s12, 3
      %p172 = pnand %p170, %p171
      %p173 = pneg %p172
      // Predicated region
      $region9: #{skip_fusing_forward.1} parent=5 // pred_check
        _
      $region10: #{skip_fusing_forward.1} parent=5 // pred_check_branch
        %175 = sbr.rel (%p172) target = $region12
      $region11: #{skip_fusing_forward.1} parent=5 // pred_region
        %s176 = ssub.s32 %s12, 1
        // Predicated region
        $region13: #{skip_fusing_forward.1} parent=11 // pred_check
          %p177 = pneg %p99
        $region14: #{skip_fusing_forward.1} parent=11 // pred_check_branch
          %179 = sbr.rel (%p177) target = $region16
        $region15: #{skip_fusing_forward.1} parent=11 // pred_region
          _
        $region16: #{skip_fusing_forward.1} parent=11 // pred_fallthru
          _
        // Predicated region
        $region17: #{skip_fusing_forward.1} parent=11 // pred_check
          %p180 = pneg %p120
        $region18: #{skip_fusing_forward.1} parent=11 // pred_check_branch
          %182 = sbr.rel (%p180) target = $region20
        $region19: #{skip_fusing_forward.1} parent=11 // pred_region
          _
        $region20: #{skip_fusing_forward.1} parent=11 // pred_fallthru
          _
        // Predicated region
        $region21: #{skip_fusing_forward.1} parent=11 // pred_check
          %p183 = pneg %p141
        $region22: #{skip_fusing_forward.1} parent=11 // pred_check_branch
          %185 = sbr.rel (%p183) target = $region24
        $region23: #{skip_fusing_forward.1} parent=11 // pred_region
          _
        $region24: #{skip_fusing_forward.1} parent=11 // pred_fallthru
          _
      $region12: #{skip_fusing_forward.1} parent=5 // pred_fallthru
        _
      %p186 = scmp.lt.s32.totalorder %s12, 2
      // Predicated region
      $region25: #{skip_fusing_forward.1} parent=5 // pred_check
        %p187 = pneg %p186
      $region26: #{skip_fusing_forward.1} parent=5 // pred_check_branch
        %189 = sbr.rel (%p187) target = $region28
      $region27: #{skip_fusing_forward.1} parent=5 // pred_region
        // Predicated region
        $region29: #{skip_fusing_forward.1} parent=27 // pred_check
          %p190 = pneg %p46
        $region30: #{skip_fusing_forward.1} parent=27 // pred_check_branch
          %192 = sbr.rel (%p190) target = $region32
        $region31: #{skip_fusing_forward.1} parent=27 // pred_region
          %p193 = scmp.lt.s32.totalorder %s19, 1
          %s194 = scalar_select %p193, %s19, 1
          %p195 = scmp.lt.s32.totalorder %s20, 0
          %s196 = scalar_select %p195, %s20, 0
          %s197 = sadd.s32 %s196, %s194
          %s198 = smul.addr %s197, 8
          %s199 = scalar_lea.vmem %s0, %s198
        $region32: #{skip_fusing_forward.1} parent=27 // pred_fallthru
          _
        // Predicated region
        $region33: #{skip_fusing_forward.1} parent=27 // pred_check
          %p200 = pneg %p72
        $region34: #{skip_fusing_forward.1} parent=27 // pred_check_branch
          %202 = sbr.rel (%p200) target = $region36
        $region35: #{skip_fusing_forward.1} parent=27 // pred_region
          %p203 = scmp.lt.s32.totalorder %s19, 1
          %s204 = scalar_select %p203, %s19, 1
          %s205 = scalar_lea.vmem %s1, %s204
        $region36: #{skip_fusing_forward.1} parent=27 // pred_fallthru
          _
      $region28: #{skip_fusing_forward.1} parent=5 // pred_fallthru
        _
      %p206 = scmp.le.s32.totalorder 1, %s12
      %p207 = scmp.lt.s32.totalorder %s12, 3
      %p208 = pnand %p206, %p207
      %p209 = pneg %p208
      // Predicated region
      $region37: #{skip_fusing_forward.1} parent=5 // pred_check
        _
      $region38: #{skip_fusing_forward.1} parent=5 // pred_check_branch
        %211 = sbr.rel (%p208) target = $region40
      $region39: #{skip_fusing_forward.1} parent=5 // pred_region
        %s212 = ssub.s32 %s12, 1
        %p213 = scmp.lt.s32.totalorder %s21, 1
        %s214 = scalar_select %p213, %s21, 1
        %p215 = scmp.lt.s32.totalorder %s22, 0
        %s216 = scalar_select %p215, %s22, 0
        %s217 = sadd.s32 %s216, %s214
        %s218 = smul.addr %s217, 8
        %s219 = scalar_lea.vmem %s0, %s218
        %p220 = pneg %p52
        %p221 = pneg %p49
        %p222 = scmp.lt.s32.totalorder %s21, 1
        %s223 = scalar_select %p222, %s21, 1
        %s224 = scalar_lea.vmem %s1, %s223
        %p225 = pneg %p78
        %p226 = pneg %p75
        %p227 = pneg %p99
        %p228 = pneg %p96
        %p229 = pneg %p120
        %p230 = pneg %p117
        %p231 = pneg %p141
        %p232 = pneg %p138
        %p233 = pneg %p162
        %p234 = pneg %p159
        %p235 = scmp.lt.s32.totalorder %s21, 1
        %s236 = scalar_select %p235, %s21, 1
        %p237 = scmp.lt.s32.totalorder %s22, 0
        %s238 = scalar_select %p237, %s22, 0
        %s239 = sadd.s32 %s238, %s236
        %s240 = smul.addr %s239, 8
        %s241 = scalar_lea.vmem %s0, %s240
        %p242 = scmp.lt.s32.totalorder %s21, 1
        %s243 = scalar_select %p242, %s21, 1
        %s244 = scalar_lea.vmem %s1, %s243
        %p245 = scmp.eq.s32.totalorder %s21, 0
        %p246 = scmp.eq.s32.totalorder %s22, 0
        %p247 = pnand %p245, %p246
        %p248 = pneg %p247
        // Predicated region
        $region41: #{skip_fusing_forward.1} parent=39 // pred_check
          _
        $region42: #{skip_fusing_forward.1} parent=39 // pred_check_branch
          %250 = sbr.rel (%p247) target = $region44
        $region43: #{skip_fusing_forward.1} parent=39 // pred_region
          %251 = vst [vmem:[#allocation2] sm:$0xff] 0.0
          %252 = vst [vmem:[#allocation3] sm:$0xff] 0.0
        $region44: #{skip_fusing_forward.1} parent=39 // pred_fallthru
          _
        %v253 = vld [vmem:[%s241] sm:$0xff]
        %v254 = vld [vmem:[%s2] sm:$0xff]
        %v255 = vld [vmem:[%s2 + $0x8] sm:$0xff]
        %v256 = vld [vmem:[%s2 + $0x10] sm:$0xff]
        %v257 = vld [vmem:[%s2 + $0x18] sm:$0xff]
        %v258 = vld [vmem:[%s2 + $0x20] sm:$0xff]
        %v259 = vld [vmem:[%s2 + $0x28] sm:$0xff]
        %v260 = vld [vmem:[%s2 + $0x30] sm:$0xff]
        %v261 = vld [vmem:[%s2 + $0x38] sm:$0xff]
        %v262 = vld [vmem:[%s2 + $0x40] sm:$0xff]
        %v263 = vld [vmem:[%s2 + $0x48] sm:$0xff]
        %v264 = vld [vmem:[%s2 + $0x50] sm:$0xff]
        %v265 = vld [vmem:[%s2 + $0x58] sm:$0xff]
        %v266 = vld [vmem:[%s2 + $0x60] sm:$0xff]
        %v267 = vld [vmem:[%s2 + $0x68] sm:$0xff]
        %v268 = vld [vmem:[%s2 + $0x70] sm:$0xff]
        %v269 = vld [vmem:[%s2 + $0x78] sm:$0xff]
        %v270 = vld [vmem:[%s244] sm:$0x1]
        %v272 = vperm.slane %v270, 0
        %274 = vmatpush.xpose.msra.mxu0 %v269
        %275 = vmatpush.xpose.msra.mxu0 %v268
        %276 = vmatpush.xpose.msra.mxu0 %v267
        %277 = vmatpush.xpose.msra.mxu0 %v266
        %278 = vmatpush.xpose.msra.mxu0 %v265
        %279 = vmatpush.xpose.msra.mxu0 %v264
        %280 = vmatpush.xpose.msra.mxu0 %v263
        %281 = vmatpush.xpose.msra.mxu0 %v262
        %282 = vmatpush.xpose.msra.mxu0 %v261
        %283 = vmatpush.xpose.msra.mxu0 %v260
        %284 = vmatpush.xpose.msra.mxu0 %v259
        %285 = vmatpush.xpose.msra.mxu0 %v258
        %286 = vmatpush.xpose.msra.mxu0 %v257
        %287 = vmatpush.xpose.msra.mxu0 %v256
        %288 = vmatpush.xpose.msra.mxu0 %v255
        %289 = vmatpush.xpose.msra.mxu0 %v254
        %290 = vmatmul.f32.gmra.mxu0 %v253
        %v291 = vpop.f32.mrf.mxu0
        %v292 = vadd.f32 %v272, %v291
        %293 = vdwg.mxu0
        %v294 = vmax.f32 %v292, 0.0
        %s295 = smul.u32 %s21, 8
        %s296 = smul.u32 %s22, 8
        %s297 = sadd.s32 %s295, %s296
        %s298 = scalar_lea.vmem [#allocation4], %s297
        %299 = vst [vmem:[%s298] sm:$0xff] %v294
        %v300 = vld [vmem:[#allocation2] sm:$0xff]
        %v301 = vadd.f32 %v294, 0.0
        %v302 = vadd.f32 %v300, %v301
        %303 = vst [vmem:[#allocation2] sm:$0xff] %v302
        %v304 = vld [vmem:[#allocation3] sm:$0xff]
        %v305 = vmul.f32 %v294, %v294
        %v306 = vadd.f32 %v305, 0.0
        %v307 = vadd.f32 %v304, %v306
        %308 = vst [vmem:[#allocation3] sm:$0xff] %v307
        %p309 = scmp.eq.s32.totalorder %s21, 1
        %p310 = pnand %p309, %p246
        %p311 = pneg %p310
        // Predicated region
        $region45: #{skip_fusing_forward.1} parent=39 // pred_check
          _
        $region46: #{skip_fusing_forward.1} parent=39 // pred_check_branch
          %313 = sbr.rel (%p310) target = $region48
        $region47: #{skip_fusing_forward.1} parent=39 // pred_region
          %v314 = vld [vmem:[#allocation2] sm:$0xff]
          %v315 = vrot.slane %v314, 4
          %v316 = vadd.f32 %v314, %v315
          %v317 = vrot.slane %v316, 2
          %v318 = vadd.f32 %v316, %v317
          %v319 = vrot.slane %v318, 1
          %v320 = vadd.f32 %v318, %v319
          %v321 = vld [vmem:[#allocation3] sm:$0xff]
          %v322 = vrot.slane %v321, 4
          %v323 = vadd.f32 %v321, %v322
          %v324 = vrot.slane %v323, 2
          %v325 = vadd.f32 %v323, %v324
          %v326 = vrot.slane %v325, 1
          %v327 = vadd.f32 %v325, %v326
          %v328 = vmul.f32 %v320, 0.0625
          %v329 = vmul.f32 %v327, 0.0625
          %v330 = vmul.f32 %v328, %v328
          %v331 = vsub.f32 %v329, %v330
          %v332 = vmax.f32 %v331, 0.0
          %v333 = vadd.f32 %v332, 1e-05
          %v334 = vrsqrt.pop %v333
          %v335 = vmul.f32 %v334, %v333
          %v336 = vmul.f32 %v335, %v334
          %v337 = vmul.f32 0.5, %v336
          %v338 = vsub.f32 1.5, %v337
          %v339 = vmul.f32 %v334, %v338
          %vm340 = vweird.f32 %v333
          %vm341 = vweird.f32 %v334
          %vm342 = vmor %vm340, %vm341
          %v343 = vsel %vm342, %v334, %v339
          %v344 = vld [vmem:[%s3] sm:$0x1]
          %v345 = vmul.f32 %v344, %v343
          %v346 = vld [vmem:[%s4] sm:$0x1]
          %v347 = vmul.f32 %v328, %v345
          %v348 = vsub.f32 %v346, %v347
          %v349 = vld [vmem:[#allocation4] sm:$0xff]
          %v350 = vld [vmem:[#allocation4 + $0x8] sm:$0xff]
          %v352 = vperm.slane %v345, 0
          %v354 = vmul.f32 %v349, %v352
          %v355 = vmul.f32 %v350, %v352
          %v357 = vperm.slane %v348, 0
          %v359 = vadd.f32 %v354, %v357
          %v360 = vadd.f32 %v355, %v357
          %361 = vst [vmem:[#allocation4] sm:$0xff] %v359
          %362 = vst [vmem:[#allocation4 + $0x8] sm:$0xff] %v360
        $region48: #{skip_fusing_forward.1} parent=39 // pred_fallthru
          _
        // Predicated region
        $region49: #{skip_fusing_forward.1} parent=39 // pred_check
          %p363 = pneg %p159
        $region50: #{skip_fusing_forward.1} parent=39 // pred_check_branch
          %365 = sbr.rel (%p363) target = $region52
        $region51: #{skip_fusing_forward.1} parent=39 // pred_region
          %367 = vsyncadd [#allocation5], 0
          %s368 = sshll.u32 [#allocation4], 4
          %s369 = int_to_ptr.vmem [resolvable:$true] %s368
          %s370 = sshll.u32 %s5, 4
          %s371 = int_to_ptr.hbm [resolvable:$true] %s370
          %376 = dma.vmem_to_hbm [thread:$0]  %s369, 256, %s371, [#allocation5], 128, 128, 8
        $region52: #{skip_fusing_forward.1} parent=39 // pred_fallthru
          _
        // Predicated region
        $region53: #{skip_fusing_forward.1} parent=39 // pred_check
          %p377 = pneg %p159
        $region54: #{skip_fusing_forward.1} parent=39 // pred_check_branch
          %379 = sbr.rel (%p377) target = $region56
        $region55: #{skip_fusing_forward.1} parent=39 // pred_region
          %381 = dma.done [#allocation5], 256
        $region56: #{skip_fusing_forward.1} parent=39 // pred_fallthru
          _
      $region40: #{skip_fusing_forward.1} parent=5 // pred_fallthru
        _
      %p382 = scmp.le.s32.totalorder 2, %s12
      // Predicated region
      $region57: #{skip_fusing_forward.1} parent=5 // pred_check
        %p383 = pneg %p382
      $region58: #{skip_fusing_forward.1} parent=5 // pred_check_branch
        %385 = sbr.rel (%p383) target = $region60
      $region59: #{skip_fusing_forward.1} parent=5 // pred_region
        %s386 = ssub.s32 %s12, 2
      $region60: #{skip_fusing_forward.1} parent=5 // pred_fallthru
        _
    $region6: #{skip_fusing_forward.1} parent=1 // loop_footer
      %s16 = sadd.s32 1, %s12
    $region7: #{skip_fusing_forward.1} parent=1 // loop_footer_branch
      %11 = sbr.rel target = $region3
    $region8: #{skip_fusing_forward.1} parent=1 // loop_exit
      _
    %387 = vsyncpa [#allocation5], 1
    %s388 = scalar_lea.sflag [#allocation5], 1
    %389 = vsyncpa %s388, 1

</llo_original>
